<compile_context>
chip_gen: v7x
topology: tpu7x:2x2x1
jax: 0.10.0
libtpu: 0.0.40
codegen_flags: <defaults>
</compile_context>

<pallas_src>
import functools

import jax
import jax.numpy as jnp
from jax.experimental import pallas as pl
from jax.experimental.pallas import tpu as pltpu

_VMEM_LIMIT_BYTES = 48 * 1024 * 1024   # explicit scoped-VMEM limit (fits v5e/v6e/v7x)
_ATTN_VMEM_BUDGET = 36 * 1024 * 1024   # working-set budget used when clamping tiles
_MASK_VALUE = -1e30                    # finite "-inf" for masked KV scores


# ----------------------------- projection matmul -----------------------------

def _matmul_kernel(x_ref, w_ref, o_ref, acc_ref):
    @pl.when(pl.program_id(2) == 0)
    def _():
        acc_ref[...] = jnp.zeros_like(acc_ref)

    acc_ref[...] += jnp.dot(x_ref[...], w_ref[...],
                            preferred_element_type=jnp.float32)

    @pl.when(pl.program_id(2) == pl.num_programs(2) - 1)
    def _():
        o_ref[...] = acc_ref[...].astype(o_ref.dtype)


def _pallas_matmul(x, w, *, tm=256, tn=512, tk=512):
    """(M, K) @ (K, N): token/output-tiled matmul with f32 accumulation."""
    M, K = x.shape
    N = w.shape[1]
    tm = min(tm, M)
    tn = min(tn, N)
    # Keep >=2 token tiles so both v7x TensorCores get work on the parallel axis.
    if M > 8 and pl.cdiv(M, tm) < 2:
        tm = max(8, (M // 2 + 7) // 8 * 8)
    # The reduction axis must tile exactly (padded K blocks would pollute the
    # f32 accumulator); fall back to a single full-K block otherwise.
    tk = min(tk, K)
    if K % tk != 0:
        tk = K

    grid = (pl.cdiv(M, tm), pl.cdiv(N, tn), K // tk)
    return pl.pallas_call(
        _matmul_kernel,
        out_shape=jax.ShapeDtypeStruct((M, N), x.dtype),
        grid_spec=pltpu.PrefetchScalarGridSpec(
            num_scalar_prefetch=0,
            grid=grid,
            in_specs=[
                pl.BlockSpec((tm, tk), lambda i, j, k: (i, k)),
                pl.BlockSpec((tk, tn), lambda i, j, k: (k, j)),
            ],
            out_specs=pl.BlockSpec((tm, tn), lambda i, j, k: (i, j)),
            scratch_shapes=[pltpu.VMEM((tm, tn), jnp.float32)],
        ),
        compiler_params=pltpu.CompilerParams(
            dimension_semantics=("parallel", "parallel", "arbitrary"),
            vmem_limit_bytes=_VMEM_LIMIT_BYTES),
    )(x, w)


# ------------------------------ flash attention ------------------------------

def _flash_attn_kernel(q_ref, k_ref, v_ref, o_ref, m_scr, l_scr, acc_scr,
                       *, num_heads, head_dim, sm_scale, kv_len, block_k,
                       mask_tail):
    """One (batch, q-tile, kv-tile) step, all heads processed per step.

    q_ref/k_ref/v_ref: (tq|tk, H, D) blocks of the qkv tensor (native dtype).
    o_ref:             (tq, H*D) lane-dense output block.
    Scratch: m/l (H, tq, 1) f32, acc (tq, H*D) f32 (resident across kv axis).
    """
    kv = pl.program_id(2)

    @pl.when(kv == 0)
    def _():
        m_scr[...] = jnp.full_like(m_scr, -jnp.inf)
        l_scr[...] = jnp.zeros_like(l_scr)
        acc_scr[...] = jnp.zeros_like(acc_scr)

    # Operands stay in their native dtype: bf16 inputs hit the bf16 MXU path.
    # (The softmax scale is applied to the f32 scores, so there is no per-step
    # q-side cast/scale work left to hoist.)
    q_all = q_ref[...]                                     # (tq, H, D)
    k_all = k_ref[...]                                     # (tk, H, D)
    v_all = v_ref[...]                                     # (tk, H, D)

    if mask_tail:
        kv_ids = kv * block_k + jax.lax.broadcasted_iota(
            jnp.int32, (1, block_k), 1)
        kv_valid = kv_ids < kv_len                         # (1, tk)

    for h in range(num_heads):
        sl = slice(h * head_dim, (h + 1) * head_dim)
        q_h = q_all[:, h, :]                               # (tq, D), native dtype
        k_h = k_all[:, h, :]                               # (tk, D), native dtype
        v_h = v_all[:, h, :]

        # Scores in f32 via preferred_element_type; scale applied to f32 s.
        s = jax.lax.dot_general(
            q_h, k_h, (((1,), (1,)), ((), ())),
            preferred_element_type=jnp.float32) * sm_scale  # (tq, tk)
        if mask_tail:
            s = jnp.where(kv_valid, s, _MASK_VALUE)

        m_prev = m_scr[h]                                   # (tq, 1)
        m_new = jnp.maximum(m_prev, jnp.max(s, axis=-1, keepdims=True))
        alpha = jnp.exp(m_prev - m_new)
        p = jnp.exp(s - m_new)                              # f32 softmax math (v5e-safe)

        l_scr[h] = alpha * l_scr[h] + jnp.sum(p, axis=-1, keepdims=True)
        acc_scr[:, sl] = alpha * acc_scr[:, sl] + jax.lax.dot_general(
            p.astype(v_h.dtype), v_h, (((1,), (0,)), ((), ())),
            preferred_element_type=jnp.float32)
        m_scr[h] = m_new

    @pl.when(kv == pl.num_programs(2) - 1)
    def _():
        for h in range(num_heads):
            sl = slice(h * head_dim, (h + 1) * head_dim)
            inv_l = pl.reciprocal(l_scr[h], approx=True)    # EUP slot, ~free
            o_ref[:, sl] = (acc_scr[:, sl] * inv_l).astype(o_ref.dtype)


def _flash_attention(qkv, *, sm_scale, tq, tk):
    """qkv: (B, T, 3, H, D) -> attention output (B, T, H*D)."""
    B, T, _, H, D = qkv.shape
    C = H * D
    tq = min(tq, T)
    tk = min(tk, T)

    # Clamp tiles so the per-step working set (double-buffered q/k/v/out blocks,
    # f32 scratch, live f32 score temps) also fits v7x's 64 MiB physical VMEM.
    itemsize = qkv.dtype.itemsize

    def vmem_bytes(tq_, tk_):
        blocks = 2 * (2 * tq_ + 2 * tk_) * C * itemsize     # q + out + k + v (x2 buf)
        scratch = tq_ * C * 4 + 2 * H * tq_ * 128 * 4       # acc + lane-padded m, l
        scores = 4 * tq_ * tk_ * 4                          # a few live (tq, tk) f32
        return blocks + scratch + scores

    while tk > 128 and vmem_bytes(tq, tk) > _ATTN_VMEM_BUDGET:
        tk //= 2
    while tq > 128 and vmem_bytes(tq, tk) > _ATTN_VMEM_BUDGET:
        tq //= 2
    # Keep >= 2 parallel (b, q-tile) steps so both v7x cores get work.
    if B * pl.cdiv(T, tq) < 2 and T > 8:
        tq = max(8, (T // 2 + 7) // 8 * 8)
    # Output block's second-minor dim must be a multiple of 8 (or the full T).
    if tq != T and tq % 8 != 0:
        tq = max(8, tq // 8 * 8)

    mask_tail = (T % tk) != 0
    kernel = functools.partial(
        _flash_attn_kernel, num_heads=H, head_dim=D, sm_scale=sm_scale,
        kv_len=T, block_k=tk, mask_tail=mask_tail)

    grid = (B, pl.cdiv(T, tq), pl.cdiv(T, tk))
    return pl.pallas_call(
        kernel,
        out_shape=jax.ShapeDtypeStruct((B, T, C), qkv.dtype),
        grid_spec=pltpu.PrefetchScalarGridSpec(
            num_scalar_prefetch=0,
            grid=grid,
            in_specs=[
                # q / k / v blocks come straight out of the (B, T, 3, H, D)
                # qkv tensor (no wrapper transposes); all heads per block so the
                # minor dims (H, D) are full-extent and the DMAs are lane-dense.
                pl.BlockSpec((None, tq, None, H, D),
                             lambda b, qi, ki: (b, qi, 0, 0, 0)),
                pl.BlockSpec((None, tk, None, H, D),
                             lambda b, qi, ki: (b, ki, 1, 0, 0)),
                pl.BlockSpec((None, tk, None, H, D),
                             lambda b, qi, ki: (b, ki, 2, 0, 0)),
            ],
            out_specs=pl.BlockSpec((None, tq, C),
                                   lambda b, qi, ki: (b, qi, 0)),
            scratch_shapes=[
                pltpu.VMEM((H, tq, 1), jnp.float32),   # running max m
                pltpu.VMEM((H, tq, 1), jnp.float32),   # running denom l
                pltpu.VMEM((tq, C), jnp.float32),      # lane-dense output accumulator
            ],
        ),
        compiler_params=pltpu.CompilerParams(
            dimension_semantics=("parallel", "parallel", "arbitrary"),
            vmem_limit_bytes=_VMEM_LIMIT_BYTES),
    )(qkv, qkv, qkv)


# --------------------------------- wrapper -----------------------------------

def flash_attention3_pallas(x, w_qkv, w_out, *, num_heads, tq=256, tk=512):
    """Forward pass of FlashAttention3 (eval mode, no mask, no bias)."""
    B, T, C = x.shape
    assert C % num_heads == 0
    D = C // num_heads
    N = B * T
    sm_scale = float(D) ** -0.5

    # QKV projection (no bias); the reshape to (B, T, 3, H, D) is free.
    qkv = _pallas_matmul(x.reshape(N, C), w_qkv)            # (N, 3C)
    qkv = qkv.reshape(B, T, 3, num_heads, D)

    # Multi-head scaled-dot-product attention; output already (B, T, C),
    # so no head-merge transpose is needed before the output projection.
    attn = _flash_attention(qkv, sm_scale=sm_scale, tq=tq, tk=tk)

    # Output projection (no bias).
    out = _pallas_matmul(attn.reshape(N, C), w_out)
    # TODO(synk): nn.Dropout(dropout) treated as identity (eval / rate 0.0).
    return out.reshape(B, T, C)


# ------------------------------ pure-JAX reference ---------------------------

def flash_attention3_ref(x, w_qkv, w_out, *, num_heads):
    B, T, C = x.shape
    D = C // num_heads
    qkv = (x.reshape(-1, C) @ w_qkv).reshape(B, T, 3, num_heads, D)
    q = jnp.moveaxis(qkv[:, :, 0], 2, 1)     # (B, H, T, D)
    k = jnp.moveaxis(qkv[:, :, 1], 2, 1)
    v = jnp.moveaxis(qkv[:, :, 2], 2, 1)
    s = jnp.einsum('bhqd,bhkd->bhqk', q, k) * (float(D) ** -0.5)
    p = jax.nn.softmax(s, axis=-1)
    o = jnp.einsum('bhqk,bhkd->bhqd', p, v)
    o = jnp.moveaxis(o, 1, 2).reshape(-1, C)
    return (o @ w_out).reshape(B, T, C)


if __name__ == "__main__":
    B, T = 2, 8                 # batch, sequence length
    EMBED_DIM = 32              # n_embed
    NUM_HEADS = 4               # n_head  -> head_dim = 8

    key = jax.random.PRNGKey(0)
    k_x, k_qkv, k_out = jax.random.split(key, 3)
    scale = 0.05
    x = jax.random.normal(k_x, (B, T, EMBED_DIM), jnp.float32)
    w_qkv = scale * jax.random.normal(k_qkv, (EMBED_DIM, 3 * EMBED_DIM),
                                      jnp.float32)
    w_out = scale * jax.random.normal(k_out, (EMBED_DIM, EMBED_DIM),
                                      jnp.float32)

    out = flash_attention3_pallas(x, w_qkv, w_out, num_heads=NUM_HEADS)
    out = jax.block_until_ready(out)

    ref = flash_attention3_ref(x, w_qkv, w_out, num_heads=NUM_HEADS)
    assert out.shape == x.shape
    err = jnp.max(jnp.abs(out - ref))
    assert jnp.allclose(out, ref, atol=2e-2, rtol=2e-2), f"max err {err}"
    print("KERNEL_OK")
</pallas_src>

<mosaic_0001>
module attributes {stable_mosaic.version = 11 : i64} {
  func.func @_matmul_kernel(%arg0: i32, %arg1: i32, %arg2: i32, %arg3: memref<8x32xf32, #tpu.memory_space<vmem>>, %arg4: memref<32x96xf32, #tpu.memory_space<vmem>>, %arg5: memref<8x96xf32, #tpu.memory_space<vmem>>, %arg6: memref<8x96xf32, #tpu.memory_space<vmem>>) attributes {dimension_semantics = [#tpu.dimension_semantics<parallel>, #tpu.dimension_semantics<parallel>, #tpu.dimension_semantics<arbitrary>], iteration_bounds = array<i64: 2, 1, 1>, scalar_prefetch = 0 : i64, scratch_operands = 1 : i64, tpu.core_type = #tpu.core_type<tc>, window_params = [{transform_indices = @transform_0, window_bounds = array<i64: 8, 32>}, {transform_indices = @transform_1, window_bounds = array<i64: 32, 96>}, {transform_indices = @transform_2, window_bounds = array<i64: 8, 96>}]} {
    %c0_i32 = arith.constant 0 : i32
    %0 = arith.cmpi eq, %arg2, %c0_i32 : i32
    %1 = arith.extui %0 : i1 to i32
    %c0_i32_0 = arith.constant 0 : i32
    %2 = arith.cmpi ne, %1, %c0_i32_0 : i32
    scf.if %2 {
      %cst_10 = arith.constant 0.000000e+00 : f32
      %12 = vector.broadcast %cst_10 : f32 to vector<8x96xf32>
      %c0_11 = arith.constant 0 : index
      %c0_12 = arith.constant 0 : index
      %13 = vector.load %arg6[%c0_11, %c0_12] : memref<8x96xf32, #tpu.memory_space<vmem>>, vector<8x96xf32>
      tpu.vector_store %arg6[%c0_11, %c0_12], %12 {strides = array<i32>} : memref<8x96xf32, #tpu.memory_space<vmem>>, vector<8x96xf32>,
    } else {
    }
    %c0 = arith.constant 0 : index
    %c0_1 = arith.constant 0 : index
    %3 = vector.load %arg6[%c0, %c0_1] : memref<8x96xf32, #tpu.memory_space<vmem>>, vector<8x96xf32>
    %c0_2 = arith.constant 0 : index
    %c0_3 = arith.constant 0 : index
    %4 = vector.load %arg3[%c0_2, %c0_3] : memref<8x32xf32, #tpu.memory_space<vmem>>, vector<8x32xf32>
    %c0_4 = arith.constant 0 : index
    %c0_5 = arith.constant 0 : index
    %5 = vector.load %arg4[%c0_4, %c0_5] : memref<32x96xf32, #tpu.memory_space<vmem>>, vector<32x96xf32>
    %cst = arith.constant dense<0.000000e+00> : vector<8x96xf32>
    %6 = tpu.matmul %4, %5, %cst {dimension_numbers = #tpu.dot_dimension_numbers<[1], [0], [0], [1], [0, 0, 1, 1], [], []>} : vector<8x32xf32>, vector<32x96xf32>, vector<8x96xf32> -> vector<8x96xf32>
    %7 = arith.addf %3, %6 : vector<8x96xf32>
    %c0_6 = arith.constant 0 : index
    %c0_7 = arith.constant 0 : index
    %8 = vector.load %arg6[%c0_6, %c0_7] : memref<8x96xf32, #tpu.memory_space<vmem>>, vector<8x96xf32>
    tpu.vector_store %arg6[%c0_6, %c0_7], %7 {strides = array<i32>} : memref<8x96xf32, #tpu.memory_space<vmem>>, vector<8x96xf32>,
    %c0_i32_8 = arith.constant 0 : i32
    %9 = arith.cmpi eq, %arg2, %c0_i32_8 : i32
    %10 = arith.extui %9 : i1 to i32
    %c0_i32_9 = arith.constant 0 : i32
    %11 = arith.cmpi ne, %10, %c0_i32_9 : i32
    scf.if %11 {
      %c0_10 = arith.constant 0 : index
      %c0_11 = arith.constant 0 : index
      %12 = vector.load %arg6[%c0_10, %c0_11] : memref<8x96xf32, #tpu.memory_space<vmem>>, vector<8x96xf32>
      %c0_12 = arith.constant 0 : index
      %c0_13 = arith.constant 0 : index
      %13 = vector.load %arg5[%c0_12, %c0_13] : memref<8x96xf32, #tpu.memory_space<vmem>>, vector<8x96xf32>
      tpu.vector_store %arg5[%c0_12, %c0_13], %12 {strides = array<i32>} : memref<8x96xf32, #tpu.memory_space<vmem>>, vector<8x96xf32>,
    } else {
    }
    return
  }
  func.func @transform_0(%arg0: i32, %arg1: i32, %arg2: i32) -> (i32, i32) {
    %c0_i32 = arith.constant 0 : i32
    return %arg0, %arg2 : i32, i32
  }
  func.func @transform_1(%arg0: i32, %arg1: i32, %arg2: i32) -> (i32, i32) {
    %c0_i32 = arith.constant 0 : i32
    return %arg2, %arg1 : i32, i32
  }
  func.func @transform_2(%arg0: i32, %arg1: i32, %arg2: i32) -> (i32, i32) {
    %c0_i32 = arith.constant 0 : i32
    return %arg0, %arg1 : i32, i32
  }
}

</mosaic_0001>

<llo_original>
// kernel: tpu_custom_call.1
$region0: #{tpu_custom_call.1}
  #allocation0 [shape = 'u32[]', space=smem, size = 0x4, offset = 0x4, fixed_abs, tag = 'smem constant byte address 0x4 - core index']
  #allocation1 [shape = 'u32[144,128]{1,0:T(1,128)}', space=vmem, size = 0x12000, scoped, tag = 'internal scratch']
  #allocation2 [shape = 'f32[8,96]{1,0:T(8,128)}', space=vmem, size = 0x1000, scoped, tag = 'scratch operand']
  %s0 = inlined_call_operand.hbm [shape: f32[16,32], index: 0, kind: input, shape index: {}]
  %s1 = inlined_call_operand.hbm [shape: f32[32,96], index: 1, kind: input, shape index: {}]
  %s2 = inlined_call_operand.hbm [shape: f32[16,96], index: 2, kind: output, shape index: {}]
  %s3 = sld [smem:[#allocation0]]
  $region57: #{tpu_custom_call.1} parent=0
    _
  %s5 = ssub.s32 1, %s3
  %s6 = scalar_select 0, %s5, %s3
  $region1: #{tpu_custom_call.1} parent=0
    #allocation3 [shape = 'u8[8192]{0}', space=vmem, size = 0x2000, scoped, tag = 'input window, operand 0']
    #allocation4 [shape = 's32[2]{0}', space=sflag, size = 0x8, scoped, tag = 'scoped memory for tpu_custom_call.1']
    #allocation5 [shape = 's32[2]{0}', space=sflag, size = 0x8, scoped, tag = 'scoped memory for tpu_custom_call.1']
    #allocation6 [shape = 'u8[16384]{0}', space=vmem, size = 0x4000, scoped, tag = 'input window, operand 1, single buffered']
    #allocation7 [shape = 's32[1]{0}', space=sflag, size = 0x4, scoped, tag = 'scoped memory for tpu_custom_call.1']
    #allocation8 [shape = 'u8[8192]{0}', space=vmem, size = 0x2000, scoped, tag = 'output window, operand 0']
    %7 = vsyncpa [#allocation4], 0
    %s8 = scalar_lea.sflag [#allocation4], 1
    %9 = vsyncpa %s8, 0
    %10 = vsyncpa [#allocation7], 0
    %11 = vsyncpa [#allocation5], 0
    %s12 = scalar_lea.sflag [#allocation5], 1
    %13 = vsyncpa %s12, 0
    loop: start=0, step=1, limit=4
    $region2: #{tpu_custom_call.1} parent=1 // loop_pre_header
      _
    $region3: #{tpu_custom_call.1} parent=1 // loop_header
      %s15 = sphi 0, %s19
      %p16 = scmp.ge.s32.totalorder %s15, 4
      %s22 = sphi 0, %s41
      %s23 = sphi 0, %s37
      %s24 = sphi 0, %s33
      %s25 = sphi 0, %s22
      %s26 = sphi 0, %s23
      %s27 = sphi 0, %s24
      %s28 = sphi 0, %s25
      %s29 = sphi 0, %s26
      %s30 = sphi 0, %s27
      %s46 = sphi 0, %s48
      %s49 = sphi 0, %s46
      %s50 = sphi 0, %s49
      %s66 = sphi 0, %s50
      %s74 = sphi 0, %s76
      %s77 = sphi 0, %s74
      %s78 = sphi 0, %s77
      %s94 = sphi 0, %s78
      %s102 = sphi 0, %s104
      %s105 = sphi 0, %s102
      %s106 = sphi 0, %s105
      %s122 = sphi 0, %s106
    $region4: #{tpu_custom_call.1} parent=1 // loop_header_branch
      %18 = sbr.rel (%p16) target = $region8
    $region5: #{tpu_custom_call.1} parent=1 // loop_body
      %s20 = ssub.s32 %s15, 1
      %s21 = ssub.s32 %s15, 2
      %s31 = sadd.s32 1, %s24
      %p32 = scmp.ge.s32.totalorder %s31, 1
      %s33 = scalar_select %p32, 0, %s31
      %s34 = sadd.s32 1, %s23
      %s35 = scalar_select %p32, %s34, %s23
      %p36 = scmp.ge.s32.totalorder %s35, 1
      %s37 = scalar_select %p36, 0, %s35
      %s38 = sadd.s32 1, %s22
      %s39 = scalar_select %p36, %s38, %s22
      %p40 = scmp.ge.s32.totalorder %s39, 2
      %s41 = scalar_select %p40, 0, %s39
      %s42 = ssub.s32 %s22, %s41
      %s43 = ssub.s32 %s24, %s33
      %s44 = sor.u32 %s42, %s43
      %p45 = scmp.eq.s32.totalorder %s44, 0
      %s47 = sadd.s32 %s46, 1
      %s48 = scalar_select %p45, %s46, %s47
      %p51 = pneg %p45
      %p52 = scmp.eq.s32.totalorder %s15, 1
      %p53 = por %p51, %p52
      %p54 = scmp.ne.s32.totalorder %s46, %s49
      %p55 = scmp.eq.s32.totalorder %s15, 0
      %p56 = por %p54, %p55
      %p57 = scmp.ne.s32.totalorder %s46, %s49
      %p58 = scmp.eq.s32.totalorder %s20, 1
      %p59 = por %p57, %p58
      %p60 = scmp.ne.s32.totalorder %s49, %s50
      %p61 = scmp.eq.s32.totalorder %s20, 0
      %p62 = por %p60, %p61
      %p63 = scmp.ne.s32.totalorder %s49, %s50
      %p64 = scmp.eq.s32.totalorder %s21, 1
      %p65 = por %p63, %p64
      %p67 = scmp.ne.s32.totalorder %s50, %s66
      %p68 = scmp.eq.s32.totalorder %s21, 0
      %p69 = por %p67, %p68
      %s70 = ssub.s32 %s24, %s33
      %s71 = ssub.s32 %s23, %s37
      %s72 = sor.u32 %s70, %s71
      %p73 = scmp.eq.s32.totalorder %s72, 0
      %s75 = sadd.s32 %s74, 1
      %s76 = scalar_select %p73, %s74, %s75
      %p79 = pneg %p73
      %p80 = scmp.eq.s32.totalorder %s15, 1
      %p81 = por %p79, %p80
      %p82 = scmp.ne.s32.totalorder %s74, %s77
      %p83 = scmp.eq.s32.totalorder %s15, 0
      %p84 = por %p82, %p83
      %p85 = scmp.ne.s32.totalorder %s74, %s77
      %p86 = scmp.eq.s32.totalorder %s20, 1
      %p87 = por %p85, %p86
      %p88 = scmp.ne.s32.totalorder %s77, %s78
      %p89 = scmp.eq.s32.totalorder %s20, 0
      %p90 = por %p88, %p89
      %p91 = scmp.ne.s32.totalorder %s77, %s78
      %p92 = scmp.eq.s32.totalorder %s21, 1
      %p93 = por %p91, %p92
      %p95 = scmp.ne.s32.totalorder %s78, %s94
      %p96 = scmp.eq.s32.totalorder %s21, 0
      %p97 = por %p95, %p96
      %s98 = ssub.s32 %s22, %s41
      %s99 = ssub.s32 %s23, %s37
      %s100 = sor.u32 %s98, %s99
      %p101 = scmp.eq.s32.totalorder %s100, 0
      %s103 = sadd.s32 %s102, 1
      %s104 = scalar_select %p101, %s102, %s103
      %p107 = pneg %p101
      %p108 = scmp.eq.s32.totalorder %s15, 1
      %p109 = por %p107, %p108
      %p110 = scmp.ne.s32.totalorder %s102, %s105
      %p111 = scmp.eq.s32.totalorder %s15, 0
      %p112 = por %p110, %p111
      %p113 = scmp.ne.s32.totalorder %s102, %s105
      %p114 = scmp.eq.s32.totalorder %s20, 1
      %p115 = por %p113, %p114
      %p116 = scmp.ne.s32.totalorder %s105, %s106
      %p117 = scmp.eq.s32.totalorder %s20, 0
      %p118 = por %p116, %p117
      %p119 = scmp.ne.s32.totalorder %s105, %s106
      %p120 = scmp.eq.s32.totalorder %s21, 1
      %p121 = por %p119, %p120
      %p123 = scmp.ne.s32.totalorder %s106, %s122
      %p124 = scmp.eq.s32.totalorder %s21, 0
      %p125 = por %p123, %p124
      %p126 = scmp.le.s32.totalorder 1, %s15
      %p127 = scmp.lt.s32.totalorder %s15, 3
      %p128 = pnand %p126, %p127
      %p129 = pneg %p128
      // Predicated region
      $region9: #{tpu_custom_call.1} parent=5 // pred_check
        _
      $region10: #{tpu_custom_call.1} parent=5 // pred_check_branch
        %131 = sbr.rel (%p128) target = $region12
      $region11: #{tpu_custom_call.1} parent=5 // pred_region
        %s132 = ssub.s32 %s15, 1
        // Predicated region
        $region13: #{tpu_custom_call.1} parent=11 // pred_check
          %p133 = pneg %p90
        $region14: #{tpu_custom_call.1} parent=11 // pred_check_branch
          %135 = sbr.rel (%p133) target = $region16
        $region15: #{tpu_custom_call.1} parent=11 // pred_region
          %s136 = smul.u32 4, %s27
          %s138 = ssub.s32 512, 512
          %139 = vsyncadd [#allocation7], %s138
          %s140 = sadd.s32 %s26, %s136
          %s141 = smul.addr %s140, 128
          %s142 = scalar_lea.hbm %s1, %s141
          %s143 = sshll.u32 [#allocation6], 4
          %s144 = int_to_ptr.vmem [resolvable:$true] %s143
          %149 = dma.hbm_to_vmem [thread:$0]  %s142, 512, %s144, [#allocation7], 128, 128, 8
        $region16: #{tpu_custom_call.1} parent=11 // pred_fallthru
          _
      $region12: #{tpu_custom_call.1} parent=5 // pred_fallthru
        _
      %p150 = scmp.lt.s32.totalorder %s15, 2
      // Predicated region
      $region17: #{tpu_custom_call.1} parent=5 // pred_check
        %p151 = pneg %p150
      $region18: #{tpu_custom_call.1} parent=5 // pred_check_branch
        %153 = sbr.rel (%p151) target = $region20
      $region19: #{tpu_custom_call.1} parent=5 // pred_region
        // Predicated region
        $region21: #{tpu_custom_call.1} parent=19 // pred_check
          %p154 = pneg %p56
        $region22: #{tpu_custom_call.1} parent=19 // pred_check_branch
          %156 = sbr.rel (%p154) target = $region24
        $region23: #{tpu_custom_call.1} parent=19 // pred_region
          %s157 = sand.u32 %s46, 1
          %s158 = scalar_lea.sflag [#allocation4], %s157
          %s159 = sand.u32 %s46, 1
          %s160 = smul.addr %s159, 8
          %s161 = scalar_lea.vmem [#allocation3], %s160
          %s163 = ssub.s32 128, 128
          %164 = vsyncadd %s158, %s163
          %s165 = sadd.s32 %s24, %s22
          %s166 = smul.addr %s165, 128
          %s167 = scalar_lea.hbm %s0, %s166
          %s169 = sshll.u32 %s161, 4
          %s170 = int_to_ptr.vmem [resolvable:$true] %s169
          %172 = dma.hbm_to_vmem [thread:$0]  %s167, 128, %s170, %s158
        $region24: #{tpu_custom_call.1} parent=19 // pred_fallthru
          _
      $region20: #{tpu_custom_call.1} parent=5 // pred_fallthru
        _
      %p173 = scmp.le.s32.totalorder 1, %s15
      %p174 = scmp.lt.s32.totalorder %s15, 3
      %p175 = pnand %p173, %p174
      %p176 = pneg %p175
      // Predicated region
      $region25: #{tpu_custom_call.1} parent=5 // pred_check
        _
      $region26: #{tpu_custom_call.1} parent=5 // pred_check_branch
        %178 = sbr.rel (%p175) target = $region28
      $region27: #{tpu_custom_call.1} parent=5 // pred_region
        %s179 = ssub.s32 %s15, 1
        %s180 = sand.u32 %s49, 1
        %s181 = scalar_lea.sflag [#allocation4], %s180
        %s182 = sand.u32 %s49, 1
        %s183 = smul.addr %s182, 8
        %s184 = scalar_lea.vmem [#allocation3], %s183
        // Predicated region
        $region29: #{tpu_custom_call.1} parent=27 // pred_check
          %p185 = pneg %p62
        $region30: #{tpu_custom_call.1} parent=27 // pred_check_branch
          %187 = sbr.rel (%p185) target = $region32
        $region31: #{tpu_custom_call.1} parent=27 // pred_region
          %188 = dma.done %s181, 128
        $region32: #{tpu_custom_call.1} parent=27 // pred_fallthru
          _
        // Predicated region
        $region33: #{tpu_custom_call.1} parent=27 // pred_check
          %p189 = pneg %p90
        $region34: #{tpu_custom_call.1} parent=27 // pred_check_branch
          %191 = sbr.rel (%p189) target = $region36
        $region35: #{tpu_custom_call.1} parent=27 // pred_region
          %192 = dma.done [#allocation7], 512
        $region36: #{tpu_custom_call.1} parent=27 // pred_fallthru
          _
        %s193 = sand.u32 %s49, 1
        %s194 = scalar_lea.sflag [#allocation4], %s193
        %s195 = sand.u32 %s49, 1
        %s196 = smul.addr %s195, 8
        %s197 = scalar_lea.vmem [#allocation3], %s196
        %p198 = pneg %p62
        %p199 = pneg %p59
        %p200 = pneg %p90
        %p201 = pneg %p87
        %p202 = pneg %p118
        %p203 = pneg %p115
        %s204 = sand.u32 %s105, 1
        %s205 = scalar_lea.sflag [#allocation5], %s204
        %s206 = sand.u32 %s105, 1
        %s207 = smul.addr %s206, 8
        %s208 = scalar_lea.vmem [#allocation8], %s207
        %s209 = smul.u32 4, %s27
        %p210 = scmp.eq.s32.totalorder %s27, 0
        // Predicated region
        $region37: #{tpu_custom_call.1} parent=27 // pred_check
          %p211 = pneg %p210
        $region38: #{tpu_custom_call.1} parent=27 // pred_check_branch
          %213 = sbr.rel (%p211) target = $region40
        $region39: #{tpu_custom_call.1} parent=27 // pred_region
          %vm214 = vcmask 785408
          %215 = vst.msk [vmem:[#allocation2] sm:$0xff] %vm214, 0.0
        $region40: #{tpu_custom_call.1} parent=27 // pred_fallthru
          _
        %v216 = vld [vmem:[#allocation2] sm:$0xff]
        %v217 = vld [vmem:[%s184] sm:$0xff]
        %v218 = vld [vmem:[#allocation6] sm:$0xff]
        %v219 = vld [vmem:[#allocation6 + $0x8] sm:$0xff]
        %v220 = vld [vmem:[#allocation6 + $0x10] sm:$0xff]
        %v221 = vld [vmem:[#allocation6 + $0x18] sm:$0xff]
        %vm222 = vcmask 261120
        %v224 = vsel %vm222, %v217, 0
        %226 = vmatprep.subr.mxu0 0.0
        %227 = vmatpush1.msra.mxu0 %v218
        %228 = vmatprep.subr.mxu0 0.0
        %229 = vmatpush1.msra.mxu0 %v219
        %230 = vmatprep.subr.mxu0 0.0
        %231 = vmatpush1.msra.mxu0 %v220
        %232 = vmatprep.subr.mxu0 0.0
        %233 = vmatpush1.msra.mxu0 %v221
        %234 = vmatprep.subr.mxu0 0.0
        %235 = vmatpush1.msra.mxu0 0.0
        %236 = vmatprep.subr.mxu0 0.0
        %237 = vmatpush1.msra.mxu0 0.0
        %238 = vmatprep.subr.mxu0 0.0
        %239 = vmatpush1.msra.mxu0 0.0
        %240 = vmatprep.subr.mxu0 0.0
        %241 = vmatpush1.msra.mxu0 0.0
        %242 = vmatprep.subr.mxu0 0.0
        %243 = vmatpush1.msra.mxu0 0.0
        %244 = vmatprep.subr.mxu0 0.0
        %245 = vmatpush1.msra.mxu0 0.0
        %246 = vmatprep.subr.mxu0 0.0
        %247 = vmatpush1.msra.mxu0 0.0
        %248 = vmatprep.subr.mxu0 0.0
        %249 = vmatpush1.msra.mxu0 0.0
        %250 = vmatprep.subr.mxu0 0.0
        %251 = vmatpush1.msra.mxu0 0.0
        %252 = vmatprep.subr.mxu0 0.0
        %253 = vmatpush1.msra.mxu0 0.0
        %254 = vmatprep.subr.mxu0 0.0
        %255 = vmatpush1.msra.mxu0 0.0
        %256 = vmatprep.subr.mxu0 0.0
        %257 = vmatpush1.msra.mxu0 0.0
        %258 = vmatprep.subr.mxu0 0.0
        %259 = vmatpush1.msra.mxu0 0.0
        %260 = vmatprep.subr.mxu0 0.0
        %261 = vmatpush1.msra.mxu0 0.0
        %262 = vmatprep.subr.mxu0 0.0
        %263 = vmatpush1.msra.mxu0 0.0
        %264 = vmatprep.subr.mxu0 0.0
        %265 = vmatpush1.msra.mxu0 0.0
        %266 = vmatprep.subr.mxu0 0.0
        %267 = vmatpush1.msra.mxu0 0.0
        %268 = vmatprep.subr.mxu0 0.0
        %269 = vmatpush1.msra.mxu0 0.0
        %270 = vmatprep.subr.mxu0 0.0
        %271 = vmatpush1.msra.mxu0 0.0
        %272 = vmatprep.subr.mxu0 0.0
        %273 = vmatpush1.msra.mxu0 0.0
        %274 = vmatprep.subr.mxu0 0.0
        %275 = vmatpush1.msra.mxu0 0.0
        %276 = vmatprep.subr.mxu0 0.0
        %277 = vmatpush1.msra.mxu0 0.0
        %278 = vmatprep.subr.mxu0 0.0
        %279 = vmatpush1.msra.mxu0 0.0
        %280 = vmatprep.subr.mxu0 0.0
        %281 = vmatpush1.msra.mxu0 0.0
        %282 = vmatprep.subr.mxu0 0.0
        %283 = vmatpush1.msra.mxu0 0.0
        %284 = vmatprep.subr.mxu0 0.0
        %285 = vmatpush1.msra.mxu0 0.0
        %286 = vmatprep.subr.mxu0 0.0
        %287 = vmatpush1.msra.mxu0 0.0
        %288 = vmatprep.subr.mxu0 0.0
        %289 = vmatpush1.msra.mxu0 0.0
        %290 = vmatprep.mubr.f32.mxu0 0.0
        %291 = vmatmul.mubr.f32.gmra.mrb[0].mxu0 %v224
        %v292 = vpop.f32.mrb[0].mxu0
        %v293 = vadd.f32 0.0, %v292
        %v294 = vpop.f32.mrb[0].mxu0
        %295 = vdwg.mxu0
        %v296 = vadd.f32 %v216, %v293
        %vm297 = vcmask 785408
        %298 = vst.msk [vmem:[#allocation2] sm:$0xff] %vm297, %v296
        // Predicated region
        $region41: #{tpu_custom_call.1} parent=27 // pred_check
          %p299 = pneg %p210
        $region42: #{tpu_custom_call.1} parent=27 // pred_check_branch
          %301 = sbr.rel (%p299) target = $region44
        $region43: #{tpu_custom_call.1} parent=27 // pred_region
          %v302 = vld [vmem:[#allocation2] sm:$0xff]
          %303 = vst.msk [vmem:[%s208] sm:$0xff] %vm297, %v302
        $region44: #{tpu_custom_call.1} parent=27 // pred_fallthru
          _
        %s304 = sand.u32 %s105, 1
        %s305 = scalar_lea.sflag [#allocation5], %s304
        %s306 = sand.u32 %s105, 1
        %s307 = smul.addr %s306, 8
        %s308 = scalar_lea.vmem [#allocation8], %s307
        // Predicated region
        $region45: #{tpu_custom_call.1} parent=27 // pred_check
          %p309 = pneg %p115
        $region46: #{tpu_custom_call.1} parent=27 // pred_check_branch
          %311 = sbr.rel (%p309) target = $region48
        $region47: #{tpu_custom_call.1} parent=27 // pred_region
          %s313 = ssub.s32 128, 128
          %314 = vsyncadd %s305, %s313
          %s315 = sadd.s32 %s26, %s25
          %s316 = smul.addr %s315, 128
          %s317 = scalar_lea.hbm %s2, %s316
          %s319 = sshll.u32 %s308, 4
          %s320 = int_to_ptr.vmem [resolvable:$true] %s319
          %322 = dma.vmem_to_hbm [thread:$0]  %s320, 128, %s317, %s305
        $region48: #{tpu_custom_call.1} parent=27 // pred_fallthru
          _
      $region28: #{tpu_custom_call.1} parent=5 // pred_fallthru
        _
      %p323 = scmp.le.s32.totalorder 2, %s15
      // Predicated region
      $region49: #{tpu_custom_call.1} parent=5 // pred_check
        %p324 = pneg %p323
      $region50: #{tpu_custom_call.1} parent=5 // pred_check_branch
        %326 = sbr.rel (%p324) target = $region52
      $region51: #{tpu_custom_call.1} parent=5 // pred_region
        %s327 = ssub.s32 %s15, 2
        // Predicated region
        $region53: #{tpu_custom_call.1} parent=51 // pred_check
          %p328 = pneg %p121
        $region54: #{tpu_custom_call.1} parent=51 // pred_check_branch
          %330 = sbr.rel (%p328) target = $region56
        $region55: #{tpu_custom_call.1} parent=51 // pred_region
          %s331 = sand.u32 %s106, 1
          %s332 = scalar_lea.sflag [#allocation5], %s331
          %s333 = sand.u32 %s106, 1
          %s334 = smul.addr %s333, 8
          %s335 = scalar_lea.vmem [#allocation8], %s334
          %336 = dma.done %s332, 128
        $region56: #{tpu_custom_call.1} parent=51 // pred_fallthru
          _
      $region52: #{tpu_custom_call.1} parent=5 // pred_fallthru
        _
    $region6: #{tpu_custom_call.1} parent=1 // loop_footer
      %s19 = sadd.s32 1, %s15
    $region7: #{tpu_custom_call.1} parent=1 // loop_footer_branch
      %14 = sbr.rel target = $region3
    $region8: #{tpu_custom_call.1} parent=1 // loop_exit
      _
    %337 = vsyncpa [#allocation4], 1
    %s338 = scalar_lea.sflag [#allocation4], 1
    %339 = vsyncpa %s338, 1
    %340 = vsyncpa [#allocation7], 1
    %341 = vsyncpa [#allocation5], 1
    %s342 = scalar_lea.sflag [#allocation5], 1
    %343 = vsyncpa %s342, 1

</llo_original>
